<compile_context>
chip_gen: v5e
topology: v5e:2x2
jax: 0.10.0
libtpu: 0.0.40
codegen_flags: <defaults>
</compile_context>

<pallas_src>
import functools

import jax
import jax.numpy as jnp
from jax.experimental import pallas as pl
from jax.experimental.pallas import tpu as pltpu

LANE = 128  # vreg lane width


def _round_up(x, m):
    return ((x + m - 1) // m) * m


def _sublane_grain(dtype):
    # f32 -> 8, bf16 -> 16, int8/fp8 -> 32 (sub-32-bit dtypes pack sublanes).
    return max(8, 32 // jnp.dtype(dtype).itemsize)


def _pick_tile(padded, max_tile):
    """Largest multiple of LANE that divides `padded` and is <= max_tile."""
    t = max(LANE, (min(max_tile, padded) // LANE) * LANE)
    while padded % t != 0:
        t -= LANE
    return t


def _pad2d(a, shape):
    if a.shape == tuple(shape):
        return a
    return jnp.zeros(shape, a.dtype).at[: a.shape[0], : a.shape[1]].set(a)


def expert_kernel(x_ref, w1_ref, b1_ref, w2_ref, b2_ref, o_ref,
                  acc_fc1, acc_out):
    h = pl.program_id(1)
    k = pl.program_id(2)
    nh = pl.num_programs(1)
    nk = pl.num_programs(2)

    @pl.when(jnp.logical_and(h == 0, k == 0))
    def _init_out():
        acc_out[...] = jnp.zeros_like(acc_out)

    @pl.when(k == 0)
    def _init_fc1():
        # Fold the fc1 bias into the accumulator init (keeps the epilogue lean).
        acc_fc1[...] = jnp.broadcast_to(
            b1_ref[...].astype(jnp.float32), acc_fc1.shape
        )

    # fc1 partial product for this (batch, hidden, K) tile: MXU, f32 accumulate.
    acc_fc1[...] += jnp.dot(
        x_ref[...], w1_ref[...], preferred_element_type=jnp.float32
    )

    @pl.when(k == nk - 1)
    def _finish_hidden_tile():
        # ReLU + fc2 (single output unit): VPU multiply against the [1, th]
        # w2 row + XLU lane reduction (an MXU matmul with N=1 would light up
        # 1/128th of the systolic array).
        hidden = jnp.maximum(acc_fc1[...], 0.0)
        partial = jnp.sum(
            hidden * w2_ref[...].astype(jnp.float32), axis=-1, keepdims=True
        )
        acc_out[...] += partial

        @pl.when(h == nh - 1)
        def _store():
            o_ref[...] = (acc_out[...] + b2_ref[0, 0]).astype(o_ref.dtype)


@functools.partial(
    jax.jit,
    static_argnames=("block_m", "block_h", "block_k", "mxu_dtype"),
)
def expert_forward(x, w1, b1, w2, b2, *,
                   block_m=256, block_h=512, block_k=512,
                   mxu_dtype=jnp.bfloat16):
    """Expert forward pass.

    x : [B, D_in]; w1: [D_in, H]; b1: [H]; w2: [H, 1]; b2: [1]  ->  [B, 1]
    MXU operands are cast to `mxu_dtype` (default bf16); accumulation is f32.
    Pass mxu_dtype=None to keep the original (e.g. f32) operand precision.
    """
    B, D_in = x.shape
    H = w1.shape[1]
    out_dtype = x.dtype

    x_dtype = jnp.dtype(mxu_dtype) if mxu_dtype is not None else x.dtype
    w_dtype = jnp.dtype(mxu_dtype) if mxu_dtype is not None else w1.dtype

    # ---- tile geometry (grain depends on the MXU operand dtype) ----------
    grain_m = _sublane_grain(x_dtype)
    d_pad = _round_up(D_in, LANE)
    h_pad = _round_up(H, LANE)
    tk = _pick_tile(d_pad, block_k)      # divides d_pad exactly
    th = _pick_tile(h_pad, block_h)      # divides h_pad exactly
    tm = _round_up(min(block_m, _round_up(B, grain_m)), grain_m)
    b_pad = _round_up(B, tm)

    # ---- pad (skipped when already aligned) + cast MXU operands ----------
    x_p = _pad2d(x.astype(x_dtype), (b_pad, d_pad))
    w1_p = _pad2d(w1.astype(w_dtype), (d_pad, h_pad))
    b1_p = _pad2d(b1.reshape(1, H).astype(jnp.float32), (1, h_pad))
    # fc2 weight pre-transposed to a lane-dense row [1, H_pad]; kept f32.
    w2_p = _pad2d(w2.reshape(1, H).astype(jnp.float32), (1, h_pad))
    b2_p = b2.reshape(1, 1).astype(jnp.float32)

    grid = (b_pad // tm, h_pad // th, d_pad // tk)

    # ---- VMEM budget (double-buffered streams + accumulators) ------------
    xb = jnp.dtype(x_dtype).itemsize
    wb = jnp.dtype(w_dtype).itemsize
    ob = jnp.dtype(out_dtype).itemsize
    vmem_bytes = (
        2 * tm * tk * xb          # x tile (double-buffered)
        + 2 * tk * th * wb        # w1 tile (double-buffered)
        + 2 * 2 * th * 4          # b1 + w2 rows (double-buffered)
        + tm * th * 4             # fc1 accumulator
        + tm * 4                  # fc2 accumulator
        + 2 * tm * ob             # output block
    )
    vmem_limit = max(min(2 * vmem_bytes + (2 << 20), 64 << 20), 16 << 20)

    out_padded = pl.pallas_call(
        expert_kernel,
        out_shape=jax.ShapeDtypeStruct((b_pad, 1), out_dtype),
        grid_spec=pltpu.PrefetchScalarGridSpec(
            num_scalar_prefetch=0,
            grid=grid,
            in_specs=[
                pl.BlockSpec((tm, tk), lambda i, h, k: (i, k)),      # x tile
                pl.BlockSpec((tk, th), lambda i, h, k: (k, h)),      # w1 tile
                pl.BlockSpec((1, th), lambda i, h, k: (0, h)),       # b1 row
                pl.BlockSpec((1, th), lambda i, h, k: (0, h)),       # w2 row
                pl.BlockSpec(memory_space=pltpu.MemorySpace.SMEM),   # b2 scalar
            ],
            out_specs=pl.BlockSpec((tm, 1), lambda i, h, k: (i, 0)),
            scratch_shapes=[
                pltpu.VMEM((tm, th), jnp.float32),   # fc1 accumulator
                pltpu.VMEM((tm, 1), jnp.float32),    # fc2 accumulator
            ],
        ),
        compiler_params=pltpu.CompilerParams(
            # batch tiles independent (megacore-shardable); H and K are
            # reduction axes and must stay last + "arbitrary".
            dimension_semantics=("parallel", "arbitrary", "arbitrary"),
            vmem_limit_bytes=int(vmem_limit),
        ),
    )(x_p, w1_p, b1_p, w2_p, b2_p)

    return out_padded[:B]


def expert_reference(x, w1, b1, w2, b2):
    h = jnp.maximum(x @ w1 + b1, 0.0)
    return h @ w2 + b2


if __name__ == "__main__":
    batch = 8
    input_dim = 32
    hidden_dim = 64

    key = jax.random.PRNGKey(0)
    kx, kw1, kb1, kw2, kb2 = jax.random.split(key, 5)

    # Deterministic init mimicking nn.Linear's uniform(-1/sqrt(fan_in), ...).
    bound1 = 1.0 / (input_dim ** 0.5)
    bound2 = 1.0 / (hidden_dim ** 0.5)
    w1 = jax.random.uniform(kw1, (input_dim, hidden_dim), jnp.float32, -bound1, bound1)
    b1 = jax.random.uniform(kb1, (hidden_dim,), jnp.float32, -bound1, bound1)
    w2 = jax.random.uniform(kw2, (hidden_dim, 1), jnp.float32, -bound2, bound2)
    b2 = jax.random.uniform(kb2, (1,), jnp.float32, -bound2, bound2)

    x = jax.random.normal(kx, (batch, input_dim), jnp.float32)

    ref = expert_reference(x, w1, b1, w2, b2)

    # Default path: bf16 MXU operands, f32 accumulation (looser tolerance).
    out_bf16 = jax.block_until_ready(expert_forward(x, w1, b1, w2, b2))
    assert out_bf16.shape == (batch, 1), out_bf16.shape
    assert jnp.allclose(out_bf16, ref, atol=5e-2, rtol=5e-2), "bf16 path mismatch"

    # Strict-accuracy path: f32 MXU operands.
    out_f32 = jax.block_until_ready(
        expert_forward(x, w1, b1, w2, b2, mxu_dtype=None)
    )
    assert out_f32.shape == (batch, 1), out_f32.shape
    assert jnp.allclose(out_f32, ref, atol=1e-4, rtol=1e-4), "f32 path mismatch"

    print("KERNEL_OK")
</pallas_src>

<mosaic_0001>
module attributes {stable_mosaic.version = 11 : i64} {
  func.func @expert_kernel(%arg0: i32, %arg1: i32, %arg2: i32, %arg3: memref<16x128xbf16, #tpu.memory_space<vmem>>, %arg4: memref<128x128xbf16, #tpu.memory_space<vmem>>, %arg5: memref<1x128xf32, #tpu.memory_space<vmem>>, %arg6: memref<1x128xf32, #tpu.memory_space<vmem>>, %arg7: memref<1x1xf32, #tpu.memory_space<smem>>, %arg8: memref<16x1xf32, #tpu.memory_space<vmem>>, %arg9: memref<16x128xf32, #tpu.memory_space<vmem>>, %arg10: memref<16x1xf32, #tpu.memory_space<vmem>>) attributes {dimension_semantics = [#tpu.dimension_semantics<parallel>, #tpu.dimension_semantics<arbitrary>, #tpu.dimension_semantics<arbitrary>], iteration_bounds = array<i64: 1, 1, 1>, scalar_prefetch = 0 : i64, scratch_operands = 2 : i64, tpu.core_type = #tpu.core_type<tc>, window_params = [{transform_indices = @transform_0, window_bounds = array<i64: 16, 128>}, {transform_indices = @transform_1, window_bounds = array<i64: 128, 128>}, {transform_indices = @transform_2, window_bounds = array<i64: 1, 128>}, {transform_indices = @transform_3, window_bounds = array<i64: 1, 128>}, {transform_indices = @transform_4, window_bounds = array<i64: 1, 1>}, {transform_indices = @transform_5, window_bounds = array<i64: 16, 1>}]} {
    %c0_i32 = arith.constant 0 : i32
    %0 = arith.cmpi eq, %arg1, %c0_i32 : i32
    %c0_i32_0 = arith.constant 0 : i32
    %1 = arith.cmpi eq, %arg2, %c0_i32_0 : i32
    %2 = arith.andi %0, %1 : i1
    %3 = arith.extui %2 : i1 to i32
    %c0_i32_1 = arith.constant 0 : i32
    %4 = arith.cmpi ne, %3, %c0_i32_1 : i32
    scf.if %4 {
      %cst_13 = arith.constant 0.000000e+00 : f32
      %17 = vector.broadcast %cst_13 : f32 to vector<16x1xf32>
      %c0_14 = arith.constant 0 : index
      %c0_15 = arith.constant 0 : index
      %18 = vector.load %arg10[%c0_14, %c0_15] : memref<16x1xf32, #tpu.memory_space<vmem>>, vector<16x1xf32>
      tpu.vector_store %arg10[%c0_14, %c0_15], %17 {strides = array<i32>} : memref<16x1xf32, #tpu.memory_space<vmem>>, vector<16x1xf32>,
    } else {
    }
    %c0_i32_2 = arith.constant 0 : i32
    %5 = arith.cmpi eq, %arg2, %c0_i32_2 : i32
    %6 = arith.extui %5 : i1 to i32
    %c0_i32_3 = arith.constant 0 : i32
    %7 = arith.cmpi ne, %6, %c0_i32_3 : i32
    scf.if %7 {
      %c0_13 = arith.constant 0 : index
      %c0_14 = arith.constant 0 : index
      %17 = vector.load %arg5[%c0_13, %c0_14] : memref<1x128xf32, #tpu.memory_space<vmem>>, vector<1x128xf32>
      %18 = vector.shape_cast %17 : vector<1x128xf32> to vector<1x128xf32>
      %19 = vector.broadcast %18 : vector<1x128xf32> to vector<16x128xf32>
      %c0_15 = arith.constant 0 : index
      %c0_16 = arith.constant 0 : index
      %20 = vector.load %arg9[%c0_15, %c0_16] : memref<16x128xf32, #tpu.memory_space<vmem>>, vector<16x128xf32>
      tpu.vector_store %arg9[%c0_15, %c0_16], %19 {strides = array<i32>} : memref<16x128xf32, #tpu.memory_space<vmem>>, vector<16x128xf32>,
    } else {
    }
    %c0 = arith.constant 0 : index
    %c0_4 = arith.constant 0 : index
    %8 = vector.load %arg9[%c0, %c0_4] : memref<16x128xf32, #tpu.memory_space<vmem>>, vector<16x128xf32>
    %c0_5 = arith.constant 0 : index
    %c0_6 = arith.constant 0 : index
    %9 = vector.load %arg3[%c0_5, %c0_6] : memref<16x128xbf16, #tpu.memory_space<vmem>>, vector<16x128xbf16>
    %c0_7 = arith.constant 0 : index
    %c0_8 = arith.constant 0 : index
    %10 = vector.load %arg4[%c0_7, %c0_8] : memref<128x128xbf16, #tpu.memory_space<vmem>>, vector<128x128xbf16>
    %cst = arith.constant dense<0.000000e+00> : vector<16x128xf32>
    %11 = tpu.matmul %9, %10, %cst {dimension_numbers = #tpu.dot_dimension_numbers<[1], [0], [0], [1], [0, 0, 1, 1], [], []>} : vector<16x128xbf16>, vector<128x128xbf16>, vector<16x128xf32> -> vector<16x128xf32>
    %12 = arith.addf %8, %11 : vector<16x128xf32>
    %c0_9 = arith.constant 0 : index
    %c0_10 = arith.constant 0 : index
    %13 = vector.load %arg9[%c0_9, %c0_10] : memref<16x128xf32, #tpu.memory_space<vmem>>, vector<16x128xf32>
    tpu.vector_store %arg9[%c0_9, %c0_10], %12 {strides = array<i32>} : memref<16x128xf32, #tpu.memory_space<vmem>>, vector<16x128xf32>,
    %c0_i32_11 = arith.constant 0 : i32
    %14 = arith.cmpi eq, %arg2, %c0_i32_11 : i32
    %15 = arith.extui %14 : i1 to i32
    %c0_i32_12 = arith.constant 0 : i32
    %16 = arith.cmpi ne, %15, %c0_i32_12 : i32
    scf.if %16 {
      %c0_13 = arith.constant 0 : index
      %c0_14 = arith.constant 0 : index
      %17 = vector.load %arg9[%c0_13, %c0_14] : memref<16x128xf32, #tpu.memory_space<vmem>>, vector<16x128xf32>
      %cst_15 = arith.constant 0.000000e+00 : f32
      %18 = vector.broadcast %cst_15 : f32 to vector<16x128xf32>
      %19 = arith.maximumf %17, %18 : vector<16x128xf32>
      %c0_16 = arith.constant 0 : index
      %c0_17 = arith.constant 0 : index
      %20 = vector.load %arg6[%c0_16, %c0_17] : memref<1x128xf32, #tpu.memory_space<vmem>>, vector<1x128xf32>
      %21 = vector.broadcast %20 : vector<1x128xf32> to vector<16x128xf32>
      %22 = arith.mulf %19, %21 : vector<16x128xf32>
      %cst_18 = arith.constant dense<0.000000e+00> : vector<16xf32>
      %23 = vector.multi_reduction <add>, %22, %cst_18 [1] : vector<16x128xf32> to vector<16xf32>
      %24 = vector.shape_cast %23 : vector<16xf32> to vector<16x1xf32>
      %c0_19 = arith.constant 0 : index
      %c0_20 = arith.constant 0 : index
      %25 = vector.load %arg10[%c0_19, %c0_20] : memref<16x1xf32, #tpu.memory_space<vmem>>, vector<16x1xf32>
      %26 = arith.addf %25, %24 : vector<16x1xf32>
      %c0_21 = arith.constant 0 : index
      %c0_22 = arith.constant 0 : index
      %27 = vector.load %arg10[%c0_21, %c0_22] : memref<16x1xf32, #tpu.memory_space<vmem>>, vector<16x1xf32>
      tpu.vector_store %arg10[%c0_21, %c0_22], %26 {strides = array<i32>} : memref<16x1xf32, #tpu.memory_space<vmem>>, vector<16x1xf32>,
      %c0_i32_23 = arith.constant 0 : i32
      %28 = arith.cmpi eq, %arg1, %c0_i32_23 : i32
      %29 = arith.extui %28 : i1 to i32
      %c0_i32_24 = arith.constant 0 : i32
      %30 = arith.cmpi ne, %29, %c0_i32_24 : i32
      scf.if %30 {
        %c0_25 = arith.constant 0 : index
        %c0_26 = arith.constant 0 : index
        %31 = vector.load %arg10[%c0_25, %c0_26] : memref<16x1xf32, #tpu.memory_space<vmem>>, vector<16x1xf32>
        %c0_27 = arith.constant 0 : index
        %c0_28 = arith.constant 0 : index
        %32 = memref.load %arg7[%c0_27, %c0_28] : memref<1x1xf32, #tpu.memory_space<smem>>
        %33 = vector.broadcast %32 : f32 to vector<16x1xf32>
        %34 = arith.addf %31, %33 : vector<16x1xf32>
        %c0_29 = arith.constant 0 : index
        %c0_30 = arith.constant 0 : index
        %35 = vector.load %arg8[%c0_29, %c0_30] : memref<16x1xf32, #tpu.memory_space<vmem>>, vector<16x1xf32>
        tpu.vector_store %arg8[%c0_29, %c0_30], %34 {strides = array<i32>} : memref<16x1xf32, #tpu.memory_space<vmem>>, vector<16x1xf32>,
      } else {
      }
    } else {
    }
    return
  }
  func.func @transform_0(%arg0: i32, %arg1: i32, %arg2: i32) -> (i32, i32) {
    %c0_i32 = arith.constant 0 : i32
    return %arg0, %arg2 : i32, i32
  }
  func.func @transform_1(%arg0: i32, %arg1: i32, %arg2: i32) -> (i32, i32) {
    %c0_i32 = arith.constant 0 : i32
    return %arg2, %arg1 : i32, i32
  }
  func.func @transform_2(%arg0: i32, %arg1: i32, %arg2: i32) -> (i32, i32) {
    %c0_i32 = arith.constant 0 : i32
    %c0_i32_0 = arith.constant 0 : i32
    return %c0_i32, %arg1 : i32, i32
  }
  func.func @transform_3(%arg0: i32, %arg1: i32, %arg2: i32) -> (i32, i32) {
    %c0_i32 = arith.constant 0 : i32
    %c0_i32_0 = arith.constant 0 : i32
    return %c0_i32, %arg1 : i32, i32
  }
  func.func @transform_4(%arg0: i32, %arg1: i32, %arg2: i32) -> (i32, i32) {
    %c0_i32 = arith.constant 0 : i32
    %c0_i32_0 = arith.constant 0 : i32
    %c0_i32_1 = arith.constant 0 : i32
    return %c0_i32, %c0_i32_0 : i32, i32
  }
  func.func @transform_5(%arg0: i32, %arg1: i32, %arg2: i32) -> (i32, i32) {
    %c0_i32 = arith.constant 0 : i32
    %c0_i32_0 = arith.constant 0 : i32
    return %arg0, %c0_i32 : i32, i32
  }
}

</mosaic_0001>

<llo_original>
// kernel: expert_forward.1
$region0: #{expert_forward.1}
  #allocation0 [shape = 'u32[]', space=smem, size = 0x4, offset = 0x4, fixed_abs, tag = 'smem constant byte address 0x4 - core index']
  #allocation1 [shape = 'u32[72,128]{1,0:T(1,128)}', space=vmem, size = 0x9000, scoped, tag = 'internal scratch']
  #allocation2 [shape = 'f32[16,128]{1,0:T(8,128)}', space=vmem, size = 0x2000, scoped, tag = 'scratch operand']
  #allocation3 [shape = 'f32[16,1]{1,0:T(8,128)}', space=vmem, size = 0x2000, scoped, tag = 'scratch operand']
  #allocation4 [shape = 'f32[1,1]{1,0:T(1,128)S(6)}', space=smem, size = 0x200, scoped, tag = 'scoped memory for expert_forward.1']
  %s0 = inlined_call_operand.vmem [shape: bf16[16,128], index: 0, kind: input, shape index: {}]
  %s1 = inlined_call_operand.vmem [shape: bf16[128,128], index: 1, kind: input, shape index: {}]
  %s2 = inlined_call_operand.vmem [shape: f32[1,128], index: 2, kind: input, shape index: {}]
  %s3 = inlined_call_operand.vmem [shape: f32[1,128], index: 3, kind: input, shape index: {}]
  %s4 = inlined_call_operand.<no memory space> [shape: f32[1,1], index: 4, kind: input, shape index: {}]
  %s5 = inlined_call_operand.vmem [shape: f32[16,1], index: 5, kind: output, shape index: {}]
  %s6 = sld [smem:[#allocation0]]
  $region46: #{expert_forward.1} parent=0
    _
  %s8 = ssub.s32 1, %s6
  %s9 = scalar_select 0, %s8, %s6
  %10 = sst [smem:[#allocation4]] %s4
  // Predicated region
  $region2: #{expert_forward.1} parent=0 // pred_check
    _
  $region3: #{expert_forward.1} parent=0 // pred_check_branch
    %12 = sbr.rel (0) target = $region5
  $region4: #{expert_forward.1} parent=0 // pred_region
    _
  $region5: #{expert_forward.1} parent=0 // pred_fallthru
    _
  // Predicated region
  $region6: #{expert_forward.1} parent=0 // pred_check
    _
  $region7: #{expert_forward.1} parent=0 // pred_check_branch
    %14 = sbr.rel (0) target = $region9
  $region8: #{expert_forward.1} parent=0 // pred_region
    _
  $region9: #{expert_forward.1} parent=0 // pred_fallthru
    _
  // Predicated region
  $region10: #{expert_forward.1} parent=0 // pred_check
    _
  $region11: #{expert_forward.1} parent=0 // pred_check_branch
    %16 = sbr.rel (0) target = $region13
  $region12: #{expert_forward.1} parent=0 // pred_region
    _
  $region13: #{expert_forward.1} parent=0 // pred_fallthru
    _
  // Predicated region
  $region14: #{expert_forward.1} parent=0 // pred_check
    _
  $region15: #{expert_forward.1} parent=0 // pred_check_branch
    %18 = sbr.rel (0) target = $region17
  $region16: #{expert_forward.1} parent=0 // pred_region
    _
  $region17: #{expert_forward.1} parent=0 // pred_fallthru
    _
  // Predicated region
  $region18: #{expert_forward.1} parent=0 // pred_check
    _
  $region19: #{expert_forward.1} parent=0 // pred_check_branch
    %20 = sbr.rel (0) target = $region21
  $region20: #{expert_forward.1} parent=0 // pred_region
    _
  $region21: #{expert_forward.1} parent=0 // pred_fallthru
    _
  %p21 = scmp.eq.s32.totalorder 0, 0
  %p22 = scmp.eq.s32.totalorder 0, 0
  %p23 = pnand %p21, %p22
  %p24 = pneg %p23
  // Predicated region
  $region22: #{expert_forward.1} parent=0 // pred_check
    _
  $region23: #{expert_forward.1} parent=0 // pred_check_branch
    %26 = sbr.rel (%p23) target = $region25
  $region24: #{expert_forward.1} parent=0 // pred_region
    %vm27 = vcmask 7168
    %28 = vst.msk [vmem:[#allocation3] sm:$0xff] %vm27, 0.0
    %29 = vst.msk [vmem:[#allocation3 + $0x8] sm:$0xff] %vm27, 0.0
  $region25: #{expert_forward.1} parent=0 // pred_fallthru
    _
  // Predicated region
  $region26: #{expert_forward.1} parent=0 // pred_check
    %p30 = pneg %p22
  $region27: #{expert_forward.1} parent=0 // pred_check_branch
    %32 = sbr.rel (%p30) target = $region29
  $region28: #{expert_forward.1} parent=0 // pred_region
    %v33 = vld [vmem:[%s2] sm:$0x1]
    %v35 = vperm.slane %v33, 0
    %37 = vst [vmem:[#allocation2] sm:$0xff] %v35
    %38 = vst [vmem:[#allocation2 + $0x8] sm:$0xff] %v35
  $region29: #{expert_forward.1} parent=0 // pred_fallthru
    _
  %v39 = vld [vmem:[#allocation2] sm:$0xff]
  %v40 = vld [vmem:[#allocation2 + $0x8] sm:$0xff]
  %v41 = vld [vmem:[%s0] sm:$0xf]
  %v42 = vld [vmem:[%s0 + $0x4] sm:$0xf]
  %v43 = vld [vmem:[%s1] sm:$0xf]
  %v44 = vld [vmem:[%s1 + $0x4] sm:$0xf]
  %v45 = vld [vmem:[%s1 + $0x8] sm:$0xf]
  %v46 = vld [vmem:[%s1 + $0xc] sm:$0xf]
  %v47 = vld [vmem:[%s1 + $0x10] sm:$0xf]
  %v48 = vld [vmem:[%s1 + $0x14] sm:$0xf]
  %v49 = vld [vmem:[%s1 + $0x18] sm:$0xf]
  %v50 = vld [vmem:[%s1 + $0x1c] sm:$0xf]
  %v51 = vld [vmem:[%s1 + $0x20] sm:$0xf]
  %v52 = vld [vmem:[%s1 + $0x24] sm:$0xf]
  %v53 = vld [vmem:[%s1 + $0x28] sm:$0xf]
  %v54 = vld [vmem:[%s1 + $0x2c] sm:$0xf]
  %v55 = vld [vmem:[%s1 + $0x30] sm:$0xf]
  %v56 = vld [vmem:[%s1 + $0x34] sm:$0xf]
  %v57 = vld [vmem:[%s1 + $0x38] sm:$0xf]
  %v58 = vld [vmem:[%s1 + $0x3c] sm:$0xf]
  %v61 = vunpack.c.l.b16 %v41
  %v62 = vunpack.c.l.b16 %v42
  %v63 = vpack.c.b16 %v62, %v61
  %v81 = vunpack.c.l.b16 %v43
  %v82 = vunpack.c.l.b16 %v44
  %v83 = vunpack.c.l.b16 %v45
  %v84 = vunpack.c.l.b16 %v46
  %v85 = vunpack.c.l.b16 %v47
  %v86 = vunpack.c.l.b16 %v48
  %v87 = vunpack.c.l.b16 %v49
  %v88 = vunpack.c.l.b16 %v50
  %v89 = vunpack.c.l.b16 %v51
  %v90 = vunpack.c.l.b16 %v52
  %v91 = vunpack.c.l.b16 %v53
  %v92 = vunpack.c.l.b16 %v54
  %v93 = vunpack.c.l.b16 %v55
  %v94 = vunpack.c.l.b16 %v56
  %v95 = vunpack.c.l.b16 %v57
  %v96 = vunpack.c.l.b16 %v58
  %v97 = vpack.c.b16 %v82, %v81
  %v98 = vpack.c.b16 %v84, %v83
  %v99 = vpack.c.b16 %v86, %v85
  %v100 = vpack.c.b16 %v88, %v87
  %v101 = vpack.c.b16 %v90, %v89
  %v102 = vpack.c.b16 %v92, %v91
  %v103 = vpack.c.b16 %v94, %v93
  %v104 = vpack.c.b16 %v96, %v95
  %113 = vmatpush.bf16.msra.mxu0 %v104
  %114 = vmatpush.bf16.msra.mxu0 %v103
  %115 = vmatpush.bf16.msra.mxu0 %v102
  %116 = vmatpush.bf16.msra.mxu0 %v101
  %117 = vmatpush.bf16.msra.mxu0 %v100
  %118 = vmatpush.bf16.msra.mxu0 %v99
  %119 = vmatpush.bf16.msra.mxu0 %v98
  %120 = vmatpush.bf16.msra.mxu0 %v97
  %121 = vmatmul.bf16.gmra.mxu0 %v63
  %v122 = vpop.f32.mrf.mxu0
  %v123 = vadd.f32 0.0, %v122
  %v124 = vpop.f32.mrf.mxu0
  %v125 = vadd.f32 0.0, %v124
  %126 = vdwg.mxu0
  %v127 = vadd.f32 %v39, %v123
  %v128 = vadd.f32 %v40, %v125
  %129 = vst [vmem:[#allocation2] sm:$0xff] %v127
  %130 = vst [vmem:[#allocation2 + $0x8] sm:$0xff] %v128
  // Predicated region
  $region30: #{expert_forward.1} parent=0 // pred_check
    %p131 = pneg %p22
  $region31: #{expert_forward.1} parent=0 // pred_check_branch
    %133 = sbr.rel (%p131) target = $region33
  $region32: #{expert_forward.1} parent=0 // pred_region
    %v134 = vld [vmem:[#allocation2] sm:$0xff]
    %v135 = vld [vmem:[#allocation2 + $0x8] sm:$0xff]
    %v136 = vmax.f32 %v134, 0.0
    %v137 = vmax.f32 %v135, 0.0
    %v138 = vld [vmem:[%s3] sm:$0x1]
    %v140 = vperm.slane %v138, 0
    %v142 = vmul.f32 %v136, %v140
    %v143 = vmul.f32 %v137, %v140
    %144 = vadd.xlane.f32.xlu0 %v142
    %v145 = vpop.xlane.xlu0 %144
    %146 = vadd.xlane.f32.xlu0 %v143
    %v147 = vpop.xlane.xlu0 %146
    %v148 = vld [vmem:[#allocation3] sm:$0xff]
    %v149 = vld [vmem:[#allocation3 + $0x8] sm:$0xff]
    %v150 = vadd.f32 %v148, %v145
    %v151 = vadd.f32 %v149, %v147
    %vm152 = vcmask 7168
    %153 = vst.msk [vmem:[#allocation3] sm:$0xff] %vm152, %v150
    %154 = vst.msk [vmem:[#allocation3 + $0x8] sm:$0xff] %vm152, %v151
    // Predicated region
    $region34: #{expert_forward.1} parent=32 // pred_check
      %p155 = pneg %p21
    $region35: #{expert_forward.1} parent=32 // pred_check_branch
      %157 = sbr.rel (%p155) target = $region37
    $region36: #{expert_forward.1} parent=32 // pred_region
      %v158 = vld [vmem:[#allocation3] sm:$0xff]
      %v159 = vld [vmem:[#allocation3 + $0x8] sm:$0xff]
      %s160 = sld [smem:[#allocation4]]
      %v161 = vstv %s160
      %v162 = vadd.f32 %v158, %v161
      %v163 = vadd.f32 %v159, %v161
      %164 = vst.msk [vmem:[%s5] sm:$0xff] %vm152, %v162
      %165 = vst.msk [vmem:[%s5 + $0x8] sm:$0xff] %vm152, %v163
    $region37: #{expert_forward.1} parent=32 // pred_fallthru
      _
  $region33: #{expert_forward.1} parent=0 // pred_fallthru
    _
  // Predicated region
  $region38: #{expert_forward.1} parent=0 // pred_check
    _
  $region39: #{expert_forward.1} parent=0 // pred_check_branch
    %167 = sbr.rel (0) target = $region41
  $region40: #{expert_forward.1} parent=0 // pred_region
    _
  $region41: #{expert_forward.1} parent=0 // pred_fallthru
    _
  // Predicated region
  $region42: #{expert_forward.1} parent=0 // pred_check
    _
  $region43: #{expert_forward.1} parent=0 // pred_check_branch
    %169 = sbr.rel (0) target = $region45
  $region44: #{expert_forward.1} parent=0 // pred_region
    _
  $region45: #{expert_forward.1} parent=0 // pred_fallthru
    _

</llo_original>
